<compile_context>
chip_gen: v6e
topology: v6e:2x2x1
jax: 0.10.0
libtpu: 0.0.40
codegen_flags: <defaults>
</compile_context>

<pallas_src>
import jax
import jax.numpy as jnp
from jax.experimental import pallas as pl
from jax.experimental.pallas import tpu as pltpu


def _round_up(v, m):
    return (v + m - 1) // m * m


_FMA_MAX_K = 8  # contracting dims this small stay on the VPU (broadcast-FMA)


def _make_fused_mlp_kernel(layout):
    """Fused MLP kernel in transposed layout: activations are (features, tm),
    batch on the 128-lane axis.

    layout: static tuple of (mode, row_off, K, N) per layer describing where
    each layer's packed parameters live inside the single parameter slab:
      mode == "fma"    : rows hold [A^T | b]; layer = K unrolled broadcast-FMAs (VPU)
      mode == "reduce" : rows hold [A_col | bias]; layer = mul + sublane-sum (VPU/XLU)
      mode == "mxu"    : rows hold [A^T | b]; layer = MXU matmul
    """

    def kernel(x_ref, p_ref, o_ref):
        h = x_ref[...]  # (K0, tm) float32, batch on lanes
        for mode, ro, K, N in layout:
            if mode == "fma":
                # y = A^T @ h + b with tiny K: unrolled broadcast-FMA on the
                # VPU; avoids paying MXU push/pop latency for a ~2%-full pass.
                b = p_ref[ro:ro + N, K:K + 1]                      # (N, 1)
                acc = p_ref[ro:ro + N, 0:1] * h[0:1, :]            # (N, tm)
                for k in range(1, K):
                    acc = acc + p_ref[ro:ro + N, k:k + 1] * h[k:k + 1, :]
                y = acc + b
            elif mode == "reduce":
                # Final (K -> 1) layer: elementwise mul + sublane reduction.
                a_col = p_ref[ro:ro + K, 0:1]                      # (K, 1)
                bias = p_ref[ro:ro + 1, 1:2]                       # (1, 1)
                y = jnp.sum(a_col * h, axis=0, keepdims=True) + bias
            else:  # "mxu"
                at = p_ref[ro:ro + N, 0:K]                         # (N, K)
                b = p_ref[ro:ro + N, K:K + 1]                      # (N, 1)
                y = jnp.dot(
                    at, h,
                    preferred_element_type=jnp.float32,
                    precision=jax.lax.Precision.HIGHEST,
                ) + b
            h = jnp.where(y >= 0.0, y, 0.2 * y)                    # LeakyReLU(0.2)
        o_ref[...] = h.astype(o_ref.dtype)

    return kernel


def pack_params(params):
    """Pack all (A, b) into one lane-padded f32 slab + static layout.

    params: sequence of (A: (K, N) f32, b: (N,) f32), matching the PyTorch
    Layer parameters. Returns (slab (R, C) f32, layout) with
    layout[i] = (mode, row_offset, K, N).
    """
    blocks, layout = [], []
    row, max_cols = 0, 0
    for A, b in params:
        A = jnp.asarray(A, jnp.float32)
        b = jnp.asarray(b, jnp.float32).reshape(-1)
        K, N = A.shape
        if K <= _FMA_MAX_K:
            mode = "fma"
            blk = jnp.concatenate([A.T, b.reshape(N, 1)], axis=1)      # (N, K+1)
        elif N == 1:
            mode = "reduce"
            bias_col = jnp.zeros((K, 1), jnp.float32).at[0, 0].set(b[0])
            blk = jnp.concatenate([A.reshape(K, 1), bias_col], axis=1)  # (K, 2)
        else:
            mode = "mxu"
            blk = jnp.concatenate([A.T, b.reshape(N, 1)], axis=1)      # (N, K+1)
        layout.append((mode, row, K, N))
        blocks.append(blk)
        row += _round_up(blk.shape[0], 8)       # keep each block sublane-aligned
        max_cols = max(max_cols, blk.shape[1])

    total_rows = _round_up(max(row, 8), 8)
    total_cols = _round_up(max_cols, 128)        # lane-padded slab
    slab = jnp.zeros((total_rows, total_cols), jnp.float32)
    for (_, ro, _, _), blk in zip(layout, blocks):
        slab = slab.at[ro:ro + blk.shape[0], 0:blk.shape[1]].set(blk)
    return slab, tuple(layout)


def mlp_forward_pallas(x, slab, layout):
    """One fused pallas_call for the whole MLP.

    x      : (M, K_in) activations
    slab   : packed parameter slab (single DMA, VMEM-resident)
    layout : static per-layer metadata from pack_params
    """
    M, K_in = x.shape
    n_out = layout[-1][3]
    max_dim = max(max(K, N) for _, _, K, N in layout)

    # ---- batch blocking: batch maps to lanes; pad to a multiple of 128 ----
    m_pad = _round_up(max(M, 128), 128)
    tm = 128
    act_budget = 16 * 1024 * 1024  # rough budget for live (max_dim, tm) f32 intermediates
    for cand in (2048, 1024, 512, 256, 128):
        if m_pad % cand == 0 and cand * max(max_dim, 8) * 4 * 6 <= act_budget:
            tm = cand
            break
    # Prefer >=2 grid steps so the "parallel" axis can feed 2 TensorCores (v7x).
    if m_pad // tm == 1 and tm >= 256:
        tm //= 2
    grid = (m_pad // tm,)

    # Transposed, zero-padded activations: (K_in, m_pad) -> lane-dense DMAs.
    x_t = jnp.zeros((K_in, m_pad), x.dtype).at[:, :M].set(x.T)

    in_specs = [
        pl.BlockSpec((K_in, tm), lambda i: (0, i)),   # activation column block
        pl.BlockSpec(slab.shape, lambda i: (0, 0)),   # params: constant block -> resident
    ]
    out_specs = pl.BlockSpec((n_out, tm), lambda i: (0, i))  # lane-dense (tm % 128 == 0)

    out_t = pl.pallas_call(
        _make_fused_mlp_kernel(layout),
        out_shape=jax.ShapeDtypeStruct((n_out, m_pad), x.dtype),
        grid=grid,
        in_specs=in_specs,
        out_specs=out_specs,
        compiler_params=pltpu.CompilerParams(
            dimension_semantics=("parallel",),
            vmem_limit_bytes=32 * 1024 * 1024,  # fits v7x's scoped default
        ),
    )(x_t, slab)

    # Back to the PyTorch-facing layout (M, n_out).
    return out_t[:, :M].T


model_forward = jax.jit(mlp_forward_pallas, static_argnums=(2,))


def init_model_params(key, input_size, output_size, layer_sizes):
    """Deterministic randn init matching the PyTorch __init__ shapes."""
    sizes = [input_size] + list(layer_sizes) + [output_size]
    params = []
    for i in range(len(sizes) - 1):
        key, ka, kb = jax.random.split(key, 3)
        A = jax.random.normal(ka, (sizes[i], sizes[i + 1]), dtype=jnp.float32)
        B = jax.random.normal(kb, (sizes[i + 1],), dtype=jnp.float32)
        params.append((A, B))
    return tuple(params)


def model_forward_ref(x, params):
    """Pure-JAX reference (exact f32 matmuls) for correctness check."""
    for A, B in params:
        y = jnp.dot(x, A, precision=jax.lax.Precision.HIGHEST) + B
        x = jnp.where(y >= 0.0, y, 0.2 * y)
    return x


if __name__ == "__main__":
    key = jax.random.PRNGKey(0)
    key, kx = jax.random.split(key)

    # Shapes consistent with Model(input_size=2, output_size=1, layer_sizes=[32, 32])
    input_size, output_size, layer_sizes = 2, 1, [32, 32]
    batch = 8

    params = init_model_params(key, input_size, output_size, layer_sizes)
    slab, layout = pack_params(params)
    x = jax.random.normal(kx, (batch, input_size), dtype=jnp.float32)

    out = model_forward(x, slab, layout)
    out = jax.block_until_ready(out)

    ref = model_forward_ref(x, params)
    assert out.shape == (batch, output_size)
    assert jnp.allclose(out, ref, atol=1e-4, rtol=1e-4), "mismatch vs reference"

    print("KERNEL_OK")
</pallas_src>

<mosaic_0001>
module attributes {stable_mosaic.version = 11 : i64} {
  func.func @kernel(%arg0: i32, %arg1: memref<2x128xf32, #tpu.memory_space<vmem>>, %arg2: memref<96x128xf32, #tpu.memory_space<vmem>>, %arg3: memref<1x128xf32, #tpu.memory_space<vmem>>) attributes {dimension_semantics = [#tpu.dimension_semantics<parallel>], iteration_bounds = array<i64: 1>, scalar_prefetch = 0 : i64, scratch_operands = 0 : i64, tpu.core_type = #tpu.core_type<tc>, window_params = [{transform_indices = @transform_0, window_bounds = array<i64: 2, 128>}, {pipeline_mode = #tpu.pipeline_mode<synchronous>, transform_indices = @transform_1, window_bounds = array<i64: 96, 128>}, {transform_indices = @transform_2, window_bounds = array<i64: 1, 128>}]} {
    %c0 = arith.constant 0 : index
    %c0_0 = arith.constant 0 : index
    %0 = vector.load %arg1[%c0, %c0_0] : memref<2x128xf32, #tpu.memory_space<vmem>>, vector<2x128xf32>
    %c0_1 = arith.constant 0 : index
    %c2 = arith.constant 2 : index
    %1 = vector.load %arg2[%c0_1, %c2] : memref<96x128xf32, #tpu.memory_space<vmem>>, vector<32x1xf32>
    %c0_2 = arith.constant 0 : index
    %c0_3 = arith.constant 0 : index
    %2 = vector.load %arg2[%c0_2, %c0_3] : memref<96x128xf32, #tpu.memory_space<vmem>>, vector<32x1xf32>
    %3 = vector.extract_strided_slice %0 {offsets = [0, 0], sizes = [1, 128], strides = [1, 1]} : vector<2x128xf32> to vector<1x128xf32>
    %4 = vector.broadcast %2 : vector<32x1xf32> to vector<32x128xf32>
    %5 = vector.broadcast %3 : vector<1x128xf32> to vector<32x128xf32>
    %6 = arith.mulf %4, %5 : vector<32x128xf32>
    %c0_4 = arith.constant 0 : index
    %c1 = arith.constant 1 : index
    %7 = vector.load %arg2[%c0_4, %c1] : memref<96x128xf32, #tpu.memory_space<vmem>>, vector<32x1xf32>
    %8 = vector.extract_strided_slice %0 {offsets = [1, 0], sizes = [1, 128], strides = [1, 1]} : vector<2x128xf32> to vector<1x128xf32>
    %9 = vector.broadcast %7 : vector<32x1xf32> to vector<32x128xf32>
    %10 = vector.broadcast %8 : vector<1x128xf32> to vector<32x128xf32>
    %11 = arith.mulf %9, %10 : vector<32x128xf32>
    %12 = arith.addf %6, %11 : vector<32x128xf32>
    %13 = vector.broadcast %1 : vector<32x1xf32> to vector<32x128xf32>
    %14 = arith.addf %12, %13 : vector<32x128xf32>
    %cst = arith.constant 0.000000e+00 : f32
    %15 = vector.broadcast %cst : f32 to vector<32x128xf32>
    %16 = arith.cmpf oge, %14, %15 : vector<32x128xf32>
    %cst_5 = arith.constant 2.000000e-01 : f32
    %17 = vector.broadcast %cst_5 : f32 to vector<32x128xf32>
    %18 = arith.mulf %17, %14 : vector<32x128xf32>
    %19 = arith.select %16, %14, %18 : vector<32x128xi1>, vector<32x128xf32>
    %c32 = arith.constant 32 : index
    %c0_6 = arith.constant 0 : index
    %20 = vector.load %arg2[%c32, %c0_6] : memref<96x128xf32, #tpu.memory_space<vmem>>, vector<32x32xf32>
    %c32_7 = arith.constant 32 : index
    %c32_8 = arith.constant 32 : index
    %21 = vector.load %arg2[%c32_7, %c32_8] : memref<96x128xf32, #tpu.memory_space<vmem>>, vector<32x1xf32>
    %cst_9 = arith.constant dense<0.000000e+00> : vector<32x128xf32>
    %22 = tpu.matmul %20, %19, %cst_9 {dimension_numbers = #tpu.dot_dimension_numbers<[1], [0], [0], [1], [0, 0, 1, 1], [], []>, precision = #tpu.contract_precision<fp32>} : vector<32x32xf32>, vector<32x128xf32>, vector<32x128xf32> -> vector<32x128xf32>
    %23 = vector.broadcast %21 : vector<32x1xf32> to vector<32x128xf32>
    %24 = arith.addf %22, %23 : vector<32x128xf32>
    %cst_10 = arith.constant 0.000000e+00 : f32
    %25 = vector.broadcast %cst_10 : f32 to vector<32x128xf32>
    %26 = arith.cmpf oge, %24, %25 : vector<32x128xf32>
    %cst_11 = arith.constant 2.000000e-01 : f32
    %27 = vector.broadcast %cst_11 : f32 to vector<32x128xf32>
    %28 = arith.mulf %27, %24 : vector<32x128xf32>
    %29 = arith.select %26, %24, %28 : vector<32x128xi1>, vector<32x128xf32>
    %c64 = arith.constant 64 : index
    %c0_12 = arith.constant 0 : index
    %30 = vector.load %arg2[%c64, %c0_12] : memref<96x128xf32, #tpu.memory_space<vmem>>, vector<32x1xf32>
    %c64_13 = arith.constant 64 : index
    %c1_14 = arith.constant 1 : index
    %31 = vector.load %arg2[%c64_13, %c1_14] : memref<96x128xf32, #tpu.memory_space<vmem>>, vector<1x1xf32>
    %32 = vector.broadcast %30 : vector<32x1xf32> to vector<32x128xf32>
    %33 = arith.mulf %32, %29 : vector<32x128xf32>
    %cst_15 = arith.constant dense<0.000000e+00> : vector<128xf32>
    %34 = vector.multi_reduction <add>, %33, %cst_15 [0] : vector<32x128xf32> to vector<128xf32>
    %35 = vector.shape_cast %34 : vector<128xf32> to vector<1x128xf32>
    %36 = vector.broadcast %31 : vector<1x1xf32> to vector<1x128xf32>
    %37 = arith.addf %35, %36 : vector<1x128xf32>
    %cst_16 = arith.constant 0.000000e+00 : f32
    %38 = vector.broadcast %cst_16 : f32 to vector<1x128xf32>
    %39 = arith.cmpf oge, %37, %38 : vector<1x128xf32>
    %cst_17 = arith.constant 2.000000e-01 : f32
    %40 = vector.broadcast %cst_17 : f32 to vector<1x128xf32>
    %41 = arith.mulf %40, %37 : vector<1x128xf32>
    %42 = arith.select %39, %37, %41 : vector<1x128xi1>, vector<1x128xf32>
    %c0_18 = arith.constant 0 : index
    %c0_19 = arith.constant 0 : index
    %43 = vector.load %arg3[%c0_18, %c0_19] : memref<1x128xf32, #tpu.memory_space<vmem>>, vector<1x128xf32>
    tpu.vector_store %arg3[%c0_18, %c0_19], %42 {strides = array<i32>} : memref<1x128xf32, #tpu.memory_space<vmem>>, vector<1x128xf32>,
    return
  }
  func.func @transform_0(%arg0: i32) -> (i32, i32) {
    %c0_i32 = arith.constant 0 : i32
    %c0_i32_0 = arith.constant 0 : i32
    return %c0_i32, %arg0 : i32, i32
  }
  func.func @transform_1(%arg0: i32) -> (i32, i32) {
    %c0_i32 = arith.constant 0 : i32
    %c0_i32_0 = arith.constant 0 : i32
    %c0_i32_1 = arith.constant 0 : i32
    return %c0_i32, %c0_i32_0 : i32, i32
  }
  func.func @transform_2(%arg0: i32) -> (i32, i32) {
    %c0_i32 = arith.constant 0 : i32
    %c0_i32_0 = arith.constant 0 : i32
    return %c0_i32, %arg0 : i32, i32
  }
}

</mosaic_0001>

<llo_original>
// kernel: mlp_forward_pallas.1
$region0: #{mlp_forward_pallas.1}
  #allocation0 [shape = 'u32[]', space=smem, size = 0x4, offset = 0x4, fixed_abs, tag = 'smem constant byte address 0x4 - core index']
  #allocation1 [shape = 'u32[144,128]{1,0:T(1,128)}', space=vmem, size = 0x12000, scoped, tag = 'internal scratch']
  %s0 = inlined_call_operand.vmem [shape: f32[2,128], index: 0, kind: input, shape index: {}]
  %s1 = inlined_call_operand.hbm [shape: f32[96,128], index: 1, kind: input, shape index: {}]
  %s2 = inlined_call_operand.vmem [shape: f32[1,128], index: 2, kind: output, shape index: {}]
  %s3 = sld [smem:[#allocation0]]
  $region22: #{mlp_forward_pallas.1} parent=0
    _
  %s5 = ssub.s32 1, %s3
  %s6 = scalar_select 0, %s5, %s3
  $region1: #{mlp_forward_pallas.1} parent=0
    #allocation2 [shape = 'u8[49152]{0}', space=vmem, size = 0xc000, scoped, tag = 'input window, operand 1, single buffered']
    #allocation3 [shape = 's32[1]{0}', space=sflag, size = 0x4, scoped, tag = 'scoped memory for mlp_forward_pallas.1']
    %7 = vsyncpa [#allocation3], 0
    // Predicated region
    $region2: #{mlp_forward_pallas.1} parent=1 // pred_check
      _
    $region3: #{mlp_forward_pallas.1} parent=1 // pred_check_branch
      %9 = sbr.rel (0) target = $region5
    $region4: #{mlp_forward_pallas.1} parent=1 // pred_region
      _
    $region5: #{mlp_forward_pallas.1} parent=1 // pred_fallthru
      _
    // Predicated region
    $region6: #{mlp_forward_pallas.1} parent=1 // pred_check
      _
    $region7: #{mlp_forward_pallas.1} parent=1 // pred_check_branch
      %11 = sbr.rel (0) target = $region9
    $region8: #{mlp_forward_pallas.1} parent=1 // pred_region
      %s13 = ssub.s32 1536, 1536
      %14 = vsyncadd [#allocation3], %s13
      %s15 = sshll.u32 [#allocation2], 4
      %s16 = int_to_ptr.vmem [resolvable:$true] %s15
      %21 = dma.hbm_to_vmem [thread:$0]  %s1, 1536, %s16, [#allocation3], 128, 128, 8
    $region9: #{mlp_forward_pallas.1} parent=1 // pred_fallthru
      _
    // Predicated region
    $region10: #{mlp_forward_pallas.1} parent=1 // pred_check
      _
    $region11: #{mlp_forward_pallas.1} parent=1 // pred_check_branch
      %23 = sbr.rel (0) target = $region13
    $region12: #{mlp_forward_pallas.1} parent=1 // pred_region
      %24 = dma.done [#allocation3], 1536
    $region13: #{mlp_forward_pallas.1} parent=1 // pred_fallthru
      _
    %v25 = vld [vmem:[%s0] sm:$0x3]
    %v26 = vld [vmem:[#allocation2] sm:$0xff]
    %v27 = vld [vmem:[#allocation2 + $0x8] sm:$0xff]
    %v28 = vld [vmem:[#allocation2 + $0x10] sm:$0xff]
    %v29 = vld [vmem:[#allocation2 + $0x18] sm:$0xff]
    %31 = vset.pattern.permute.xlu0 0
    %32 = vperm.xlu0 %31, %v26
    %v33 = vpop.permute.xlu0 %32
    %36 = vset.pattern.permute.xlu0 0
    %37 = vperm.xlu0 %36, %v27
    %v38 = vpop.permute.xlu0 %37
    %41 = vset.pattern.permute.xlu0 0
    %42 = vperm.xlu0 %41, %v28
    %v43 = vpop.permute.xlu0 %42
    %46 = vset.pattern.permute.xlu0 0
    %47 = vperm.xlu0 %46, %v29
    %v48 = vpop.permute.xlu0 %47
    %v50 = vlaneseq
    %v51 = vshrl.u32 %v50, 7
    %v52 = vsub.s32 0, %v51
    %v53 = vrot.slane %v25, %v52
    %v54 = vmul.f32 %v33, %v53
    %v55 = vmul.f32 %v38, %v53
    %v56 = vmul.f32 %v43, %v53
    %v57 = vmul.f32 %v48, %v53
    %58 = vset.pattern.permute.xlu0 1
    %59 = vperm.xlu0 %58, %v26
    %v60 = vpop.permute.xlu0 %59
    %62 = vset.pattern.permute.xlu0 1
    %63 = vperm.xlu0 %62, %v27
    %v64 = vpop.permute.xlu0 %63
    %66 = vset.pattern.permute.xlu0 1
    %67 = vperm.xlu0 %66, %v28
    %v68 = vpop.permute.xlu0 %67
    %70 = vset.pattern.permute.xlu0 1
    %71 = vperm.xlu0 %70, %v29
    %v72 = vpop.permute.xlu0 %71
    %v74 = vlaneseq
    %v75 = vshrl.u32 %v74, 7
    %v76 = vsub.s32 1, %v75
    %v77 = vrot.slane %v25, %v76
    %v78 = vmul.f32 %v60, %v77
    %v79 = vmul.f32 %v64, %v77
    %v80 = vmul.f32 %v68, %v77
    %v81 = vmul.f32 %v72, %v77
    %v82 = vadd.f32 %v54, %v78
    %v83 = vadd.f32 %v55, %v79
    %v84 = vadd.f32 %v56, %v80
    %v85 = vadd.f32 %v57, %v81
    %86 = vset.pattern.permute.xlu0 2
    %87 = vperm.xlu0 %86, %v26
    %v88 = vpop.permute.xlu0 %87
    %90 = vset.pattern.permute.xlu0 2
    %91 = vperm.xlu0 %90, %v27
    %v92 = vpop.permute.xlu0 %91
    %94 = vset.pattern.permute.xlu0 2
    %95 = vperm.xlu0 %94, %v28
    %v96 = vpop.permute.xlu0 %95
    %98 = vset.pattern.permute.xlu0 2
    %99 = vperm.xlu0 %98, %v29
    %v100 = vpop.permute.xlu0 %99
    %v102 = vadd.f32 %v82, %v88
    %v103 = vadd.f32 %v83, %v92
    %v104 = vadd.f32 %v84, %v96
    %v105 = vadd.f32 %v85, %v100
    %vm106 = vcmp.ge.f32.partialorder %v102, 0.0
    %vm107 = vcmp.ge.f32.partialorder %v103, 0.0
    %vm108 = vcmp.ge.f32.partialorder %v104, 0.0
    %vm109 = vcmp.ge.f32.partialorder %v105, 0.0
    %v110 = vmul.f32 %v102, 0.2
    %v111 = vmul.f32 %v103, 0.2
    %v112 = vmul.f32 %v104, 0.2
    %v113 = vmul.f32 %v105, 0.2
    %v114 = vsel %vm106, %v102, %v110
    %v115 = vsel %vm107, %v103, %v111
    %v116 = vsel %vm108, %v104, %v112
    %v117 = vsel %vm109, %v105, %v113
    %v118 = vld [vmem:[#allocation2 + $0x20] sm:$0xff]
    %v119 = vld [vmem:[#allocation2 + $0x28] sm:$0xff]
    %v120 = vld [vmem:[#allocation2 + $0x30] sm:$0xff]
    %v121 = vld [vmem:[#allocation2 + $0x38] sm:$0xff]
    %123 = vset.pattern.permute.xlu0 32
    %124 = vperm.xlu0 %123, %v118
    %v125 = vpop.permute.xlu0 %124
    %128 = vset.pattern.permute.xlu0 32
    %129 = vperm.xlu0 %128, %v119
    %v130 = vpop.permute.xlu0 %129
    %133 = vset.pattern.permute.xlu0 32
    %134 = vperm.xlu0 %133, %v120
    %v135 = vpop.permute.xlu0 %134
    %138 = vset.pattern.permute.xlu0 32
    %139 = vperm.xlu0 %138, %v121
    %v140 = vpop.permute.xlu0 %139
    %vm142 = vcmask 261120
    %v143 = vsel %vm142, %v118, 0
    %v145 = vsel %vm142, %v119, 0
    %v147 = vsel %vm142, %v120, 0
    %v149 = vsel %vm142, %v121, 0
    %151 = vmatprep.subr.mxu0 0.0
    %152 = vmatpush1.msra.mxu0 0.0
    %153 = vmatprep.subr.mxu0 0.0
    %154 = vmatpush1.msra.mxu0 0.0
    %155 = vmatprep.subr.mxu0 0.0
    %156 = vmatpush1.msra.mxu0 0.0
    %157 = vmatprep.subr.mxu0 0.0
    %158 = vmatpush1.msra.mxu0 0.0
    %159 = vmatprep.subr.mxu0 0.0
    %160 = vmatpush1.msra.mxu0 0.0
    %161 = vmatprep.subr.mxu0 0.0
    %162 = vmatpush1.msra.mxu0 0.0
    %163 = vmatprep.subr.mxu0 0.0
    %164 = vmatpush1.msra.mxu0 0.0
    %165 = vmatprep.subr.mxu0 0.0
    %166 = vmatpush1.msra.mxu0 0.0
    %167 = vmatprep.subr.mxu0 0.0
    %168 = vmatpush1.msra.mxu0 0.0
    %169 = vmatprep.subr.mxu0 0.0
    %170 = vmatpush1.msra.mxu0 0.0
    %171 = vmatprep.subr.mxu0 0.0
    %172 = vmatpush1.msra.mxu0 0.0
    %173 = vmatprep.subr.mxu0 0.0
    %174 = vmatpush1.msra.mxu0 0.0
    %175 = vmatprep.subr.mxu0 0.0
    %v176 = vand.u32 %v117, 4294901760
    %177 = vmatpush1.msra.mxu0 %v176
    %178 = vmatprep.subr.mxu0 0.0
    %v179 = vand.u32 %v116, 4294901760
    %180 = vmatpush1.msra.mxu0 %v179
    %181 = vmatprep.subr.mxu0 0.0
    %v182 = vand.u32 %v115, 4294901760
    %183 = vmatpush1.msra.mxu0 %v182
    %184 = vmatprep.subr.mxu0 0.0
    %v185 = vand.u32 %v114, 4294901760
    %186 = vmatpush1.msra.mxu0 %v185
    %187 = vmatprep.subr.mxu0 0.0
    %188 = vmatpush2.msra.mxu0 0.0
    %189 = vmatprep.subr.mxu0 0.0
    %190 = vmatpush2.msra.mxu0 0.0
    %191 = vmatprep.subr.mxu0 0.0
    %192 = vmatpush2.msra.mxu0 0.0
    %193 = vmatprep.subr.mxu0 0.0
    %194 = vmatpush2.msra.mxu0 0.0
    %195 = vmatprep.subr.mxu0 0.0
    %196 = vmatpush2.msra.mxu0 0.0
    %197 = vmatprep.subr.mxu0 0.0
    %198 = vmatpush2.msra.mxu0 0.0
    %199 = vmatprep.subr.mxu0 0.0
    %200 = vmatpush2.msra.mxu0 0.0
    %201 = vmatprep.subr.mxu0 0.0
    %202 = vmatpush2.msra.mxu0 0.0
    %203 = vmatprep.subr.mxu0 0.0
    %204 = vmatpush2.msra.mxu0 0.0
    %205 = vmatprep.subr.mxu0 0.0
    %206 = vmatpush2.msra.mxu0 0.0
    %207 = vmatprep.subr.mxu0 0.0
    %208 = vmatpush2.msra.mxu0 0.0
    %209 = vmatprep.subr.mxu0 0.0
    %210 = vmatpush2.msra.mxu0 0.0
    %211 = vmatprep.subr.mxu0 0.0
    %212 = vmatpush2.msra.mxu0 0.0
    %213 = vmatprep.subr.mxu0 0.0
    %214 = vmatpush2.msra.mxu0 0.0
    %215 = vmatprep.subr.mxu0 0.0
    %216 = vmatpush2.msra.mxu0 0.0
    %217 = vmatprep.subr.mxu0 0.0
    %218 = vmatpush2.msra.mxu0 0.0
    %219 = vmatprep.mubr.f32.mxu0 0.0
    %v220 = vand.u32 %v143, 4294901760
    %v221 = vsub.f32 %v143, %v220
    %v222 = vand.u32 %v221, 4294901760
    %v223 = vsub.f32 %v221, %v222
    %v224 = vand.u32 %v223, 4294901760
    %225 = vmatmul.mubr.f32.gmra.mxu0 %v224
    %v226 = vpop.f32.mrf.mxu0
    %v227 = vadd.f32 %v125, %v226
    %v228 = vpop.f32.mrf.mxu0
    %229 = vmatprep.mubr.f32.mxu0 0.0
    %v230 = vand.u32 %v145, 4294901760
    %v231 = vsub.f32 %v145, %v230
    %v232 = vand.u32 %v231, 4294901760
    %v233 = vsub.f32 %v231, %v232
    %v234 = vand.u32 %v233, 4294901760
    %235 = vmatmul.mubr.f32.gmra.mxu0 %v234
    %v236 = vpop.f32.mrf.mxu0
    %v237 = vadd.f32 %v130, %v236
    %v238 = vpop.f32.mrf.mxu0
    %239 = vmatprep.mubr.f32.mxu0 0.0
    %v240 = vand.u32 %v147, 4294901760
    %v241 = vsub.f32 %v147, %v240
    %v242 = vand.u32 %v241, 4294901760
    %v243 = vsub.f32 %v241, %v242
    %v244 = vand.u32 %v243, 4294901760
    %245 = vmatmul.mubr.f32.gmra.mxu0 %v244
    %v246 = vpop.f32.mrf.mxu0
    %v247 = vadd.f32 %v135, %v246
    %v248 = vpop.f32.mrf.mxu0
    %249 = vmatprep.mubr.f32.mxu0 0.0
    %v250 = vand.u32 %v149, 4294901760
    %v251 = vsub.f32 %v149, %v250
    %v252 = vand.u32 %v251, 4294901760
    %v253 = vsub.f32 %v251, %v252
    %v254 = vand.u32 %v253, 4294901760
    %255 = vmatmul.mubr.f32.gmra.mxu0 %v254
    %v256 = vpop.f32.mrf.mxu0
    %v257 = vadd.f32 %v140, %v256
    %v258 = vpop.f32.mrf.mxu0
    %259 = vdwg.mxu0
    %260 = vmatprep.subr.mxu0 0.0
    %261 = vmatpush1.msra.mxu0 0.0
    %262 = vmatprep.subr.mxu0 0.0
    %263 = vmatpush1.msra.mxu0 0.0
    %264 = vmatprep.subr.mxu0 0.0
    %265 = vmatpush1.msra.mxu0 0.0
    %266 = vmatprep.subr.mxu0 0.0
    %267 = vmatpush1.msra.mxu0 0.0
    %268 = vmatprep.subr.mxu0 0.0
    %269 = vmatpush1.msra.mxu0 0.0
    %270 = vmatprep.subr.mxu0 0.0
    %271 = vmatpush1.msra.mxu0 0.0
    %272 = vmatprep.subr.mxu0 0.0
    %273 = vmatpush1.msra.mxu0 0.0
    %274 = vmatprep.subr.mxu0 0.0
    %275 = vmatpush1.msra.mxu0 0.0
    %276 = vmatprep.subr.mxu0 0.0
    %277 = vmatpush1.msra.mxu0 0.0
    %278 = vmatprep.subr.mxu0 0.0
    %279 = vmatpush1.msra.mxu0 0.0
    %280 = vmatprep.subr.mxu0 0.0
    %281 = vmatpush1.msra.mxu0 0.0
    %282 = vmatprep.subr.mxu0 0.0
    %283 = vmatpush1.msra.mxu0 0.0
    %284 = vmatprep.subr.mxu0 0.0
    %v285 = vand.u32 %v117, 4294901760
    %v286 = vsub.f32 %v117, %v285
    %v287 = vand.u32 %v286, 4294901760
    %v288 = vsub.f32 %v286, %v287
    %v289 = vand.u32 %v288, 4294901760
    %290 = vmatpush1.msra.mxu0 %v289
    %291 = vmatprep.subr.mxu0 0.0
    %v292 = vand.u32 %v116, 4294901760
    %v293 = vsub.f32 %v116, %v292
    %v294 = vand.u32 %v293, 4294901760
    %v295 = vsub.f32 %v293, %v294
    %v296 = vand.u32 %v295, 4294901760
    %297 = vmatpush1.msra.mxu0 %v296
    %298 = vmatprep.subr.mxu0 0.0
    %v299 = vand.u32 %v115, 4294901760
    %v300 = vsub.f32 %v115, %v299
    %v301 = vand.u32 %v300, 4294901760
    %v302 = vsub.f32 %v300, %v301
    %v303 = vand.u32 %v302, 4294901760
    %304 = vmatpush1.msra.mxu0 %v303
    %305 = vmatprep.subr.mxu0 0.0
    %v306 = vand.u32 %v114, 4294901760
    %v307 = vsub.f32 %v114, %v306
    %v308 = vand.u32 %v307, 4294901760
    %v309 = vsub.f32 %v307, %v308
    %v310 = vand.u32 %v309, 4294901760
    %311 = vmatpush1.msra.mxu0 %v310
    %312 = vmatprep.subr.mxu0 0.0
    %313 = vmatpush2.msra.mxu0 0.0
    %314 = vmatprep.subr.mxu0 0.0
    %315 = vmatpush2.msra.mxu0 0.0
    %316 = vmatprep.subr.mxu0 0.0
    %317 = vmatpush2.msra.mxu0 0.0
    %318 = vmatprep.subr.mxu0 0.0
    %319 = vmatpush2.msra.mxu0 0.0
    %320 = vmatprep.subr.mxu0 0.0
    %321 = vmatpush2.msra.mxu0 0.0
    %322 = vmatprep.subr.mxu0 0.0
    %323 = vmatpush2.msra.mxu0 0.0
    %324 = vmatprep.subr.mxu0 0.0
    %325 = vmatpush2.msra.mxu0 0.0
    %326 = vmatprep.subr.mxu0 0.0
    %327 = vmatpush2.msra.mxu0 0.0
    %328 = vmatprep.subr.mxu0 0.0
    %329 = vmatpush2.msra.mxu0 0.0
    %330 = vmatprep.subr.mxu0 0.0
    %331 = vmatpush2.msra.mxu0 0.0
    %332 = vmatprep.subr.mxu0 0.0
    %333 = vmatpush2.msra.mxu0 0.0
    %334 = vmatprep.subr.mxu0 0.0
    %335 = vmatpush2.msra.mxu0 0.0
    %336 = vmatprep.subr.mxu0 0.0
    %337 = vmatpush2.msra.mxu0 0.0
    %338 = vmatprep.subr.mxu0 0.0
    %339 = vmatpush2.msra.mxu0 0.0
    %340 = vmatprep.subr.mxu0 0.0
    %341 = vmatpush2.msra.mxu0 0.0
    %342 = vmatprep.subr.mxu0 0.0
    %343 = vmatpush2.msra.mxu0 0.0
    %344 = vmatprep.mubr.f32.mxu0 0.0
    %v345 = vand.u32 %v143, 4294901760
    %346 = vmatmul.mubr.f32.gmra.mxu0 %v345
    %v347 = vpop.f32.mrf.mxu0
    %v348 = vadd.f32 %v227, %v347
    %v349 = vpop.f32.mrf.mxu0
    %350 = vmatprep.mubr.f32.mxu0 0.0
    %v351 = vand.u32 %v145, 4294901760
    %352 = vmatmul.mubr.f32.gmra.mxu0 %v351
    %v353 = vpop.f32.mrf.mxu0
    %v354 = vadd.f32 %v237, %v353
    %v355 = vpop.f32.mrf.mxu0
    %356 = vmatprep.mubr.f32.mxu0 0.0
    %v357 = vand.u32 %v147, 4294901760
    %358 = vmatmul.mubr.f32.gmra.mxu0 %v357
    %v359 = vpop.f32.mrf.mxu0
    %v360 = vadd.f32 %v247, %v359
    %v361 = vpop.f32.mrf.mxu0
    %362 = vmatprep.mubr.f32.mxu0 0.0
    %v363 = vand.u32 %v149, 4294901760
    %364 = vmatmul.mubr.f32.gmra.mxu0 %v363
    %v365 = vpop.f32.mrf.mxu0
    %v366 = vadd.f32 %v257, %v365
    %v367 = vpop.f32.mrf.mxu0
    %368 = vdwg.mxu0
    %369 = vmatprep.subr.mxu0 0.0
    %370 = vmatpush1.msra.mxu0 0.0
    %371 = vmatprep.subr.mxu0 0.0
    %372 = vmatpush1.msra.mxu0 0.0
    %373 = vmatprep.subr.mxu0 0.0
    %374 = vmatpush1.msra.mxu0 0.0
    %375 = vmatprep.subr.mxu0 0.0
    %376 = vmatpush1.msra.mxu0 0.0
    %377 = vmatprep.subr.mxu0 0.0
    %378 = vmatpush1.msra.mxu0 0.0
    %379 = vmatprep.subr.mxu0 0.0
    %380 = vmatpush1.msra.mxu0 0.0
    %381 = vmatprep.subr.mxu0 0.0
    %382 = vmatpush1.msra.mxu0 0.0
    %383 = vmatprep.subr.mxu0 0.0
    %384 = vmatpush1.msra.mxu0 0.0
    %385 = vmatprep.subr.mxu0 0.0
    %386 = vmatpush1.msra.mxu0 0.0
    %387 = vmatprep.subr.mxu0 0.0
    %388 = vmatpush1.msra.mxu0 0.0
    %389 = vmatprep.subr.mxu0 0.0
    %390 = vmatpush1.msra.mxu0 0.0
    %391 = vmatprep.subr.mxu0 0.0
    %392 = vmatpush1.msra.mxu0 0.0
    %393 = vmatprep.subr.mxu0 0.0
    %v394 = vand.u32 %v117, 4294901760
    %v395 = vsub.f32 %v117, %v394
    %396 = vmatpush1.msra.mxu0 %v395
    %397 = vmatprep.subr.mxu0 0.0
    %v398 = vand.u32 %v116, 4294901760
    %v399 = vsub.f32 %v116, %v398
    %400 = vmatpush1.msra.mxu0 %v399
    %401 = vmatprep.subr.mxu0 0.0
    %v402 = vand.u32 %v115, 4294901760
    %v403 = vsub.f32 %v115, %v402
    %404 = vmatpush1.msra.mxu0 %v403
    %405 = vmatprep.subr.mxu0 0.0
    %v406 = vand.u32 %v114, 4294901760
    %v407 = vsub.f32 %v114, %v406
    %408 = vmatpush1.msra.mxu0 %v407
    %409 = vmatprep.subr.mxu0 0.0
    %410 = vmatpush2.msra.mxu0 0.0
    %411 = vmatprep.subr.mxu0 0.0
    %412 = vmatpush2.msra.mxu0 0.0
    %413 = vmatprep.subr.mxu0 0.0
    %414 = vmatpush2.msra.mxu0 0.0
    %415 = vmatprep.subr.mxu0 0.0
    %416 = vmatpush2.msra.mxu0 0.0
    %417 = vmatprep.subr.mxu0 0.0
    %418 = vmatpush2.msra.mxu0 0.0
    %419 = vmatprep.subr.mxu0 0.0
    %420 = vmatpush2.msra.mxu0 0.0
    %421 = vmatprep.subr.mxu0 0.0
    %422 = vmatpush2.msra.mxu0 0.0
    %423 = vmatprep.subr.mxu0 0.0
    %424 = vmatpush2.msra.mxu0 0.0
    %425 = vmatprep.subr.mxu0 0.0
    %426 = vmatpush2.msra.mxu0 0.0
    %427 = vmatprep.subr.mxu0 0.0
    %428 = vmatpush2.msra.mxu0 0.0
    %429 = vmatprep.subr.mxu0 0.0
    %430 = vmatpush2.msra.mxu0 0.0
    %431 = vmatprep.subr.mxu0 0.0
    %432 = vmatpush2.msra.mxu0 0.0
    %433 = vmatprep.subr.mxu0 0.0
    %434 = vmatpush2.msra.mxu0 0.0
    %435 = vmatprep.subr.mxu0 0.0
    %436 = vmatpush2.msra.mxu0 0.0
    %437 = vmatprep.subr.mxu0 0.0
    %438 = vmatpush2.msra.mxu0 0.0
    %439 = vmatprep.subr.mxu0 0.0
    %440 = vmatpush2.msra.mxu0 0.0
    %441 = vmatprep.mubr.f32.mxu0 0.0
    %v442 = vand.u32 %v143, 4294901760
    %v443 = vsub.f32 %v143, %v442
    %444 = vmatmul.mubr.f32.gmra.mxu0 %v443
    %v445 = vpop.f32.mrf.mxu0
    %v446 = vadd.f32 %v348, %v445
    %v447 = vpop.f32.mrf.mxu0
    %448 = vmatprep.mubr.f32.mxu0 0.0
    %v449 = vand.u32 %v145, 4294901760
    %v450 = vsub.f32 %v145, %v449
    %451 = vmatmul.mubr.f32.gmra.mxu0 %v450
    %v452 = vpop.f32.mrf.mxu0
    %v453 = vadd.f32 %v354, %v452
    %v454 = vpop.f32.mrf.mxu0
    %455 = vmatprep.mubr.f32.mxu0 0.0
    %v456 = vand.u32 %v147, 4294901760
    %v457 = vsub.f32 %v147, %v456
    %458 = vmatmul.mubr.f32.gmra.mxu0 %v457
    %v459 = vpop.f32.mrf.mxu0
    %v460 = vadd.f32 %v360, %v459
    %v461 = vpop.f32.mrf.mxu0
    %462 = vmatprep.mubr.f32.mxu0 0.0
    %v463 = vand.u32 %v149, 4294901760
    %v464 = vsub.f32 %v149, %v463
    %465 = vmatmul.mubr.f32.gmra.mxu0 %v464
    %v466 = vpop.f32.mrf.mxu0
    %v467 = vadd.f32 %v366, %v466
    %v468 = vpop.f32.mrf.mxu0
    %469 = vdwg.mxu0
    %470 = vmatprep.subr.mxu0 0.0
    %471 = vmatpush1.msra.mxu0 0.0
    %472 = vmatprep.subr.mxu0 0.0
    %473 = vmatpush1.msra.mxu0 0.0
    %474 = vmatprep.subr.mxu0 0.0
    %475 = vmatpush1.msra.mxu0 0.0
    %476 = vmatprep.subr.mxu0 0.0
    %477 = vmatpush1.msra.mxu0 0.0
    %478 = vmatprep.subr.mxu0 0.0
    %479 = vmatpush1.msra.mxu0 0.0
    %480 = vmatprep.subr.mxu0 0.0
    %481 = vmatpush1.msra.mxu0 0.0
    %482 = vmatprep.subr.mxu0 0.0
    %483 = vmatpush1.msra.mxu0 0.0
    %484 = vmatprep.subr.mxu0 0.0
    %485 = vmatpush1.msra.mxu0 0.0
    %486 = vmatprep.subr.mxu0 0.0
    %487 = vmatpush1.msra.mxu0 0.0
    %488 = vmatprep.subr.mxu0 0.0
    %489 = vmatpush1.msra.mxu0 0.0
    %490 = vmatprep.subr.mxu0 0.0
    %491 = vmatpush1.msra.mxu0 0.0
    %492 = vmatprep.subr.mxu0 0.0
    %493 = vmatpush1.msra.mxu0 0.0
    %494 = vmatprep.subr.mxu0 0.0
    %v495 = vand.u32 %v117, 4294901760
    %496 = vmatpush1.msra.mxu0 %v495
    %497 = vmatprep.subr.mxu0 0.0
    %v498 = vand.u32 %v116, 4294901760
    %499 = vmatpush1.msra.mxu0 %v498
    %500 = vmatprep.subr.mxu0 0.0
    %v501 = vand.u32 %v115, 4294901760
    %502 = vmatpush1.msra.mxu0 %v501
    %503 = vmatprep.subr.mxu0 0.0
    %v504 = vand.u32 %v114, 4294901760
    %505 = vmatpush1.msra.mxu0 %v504
    %506 = vmatprep.subr.mxu0 0.0
    %507 = vmatpush2.msra.mxu0 0.0
    %508 = vmatprep.subr.mxu0 0.0
    %509 = vmatpush2.msra.mxu0 0.0
    %510 = vmatprep.subr.mxu0 0.0
    %511 = vmatpush2.msra.mxu0 0.0
    %512 = vmatprep.subr.mxu0 0.0
    %513 = vmatpush2.msra.mxu0 0.0
    %514 = vmatprep.subr.mxu0 0.0
    %515 = vmatpush2.msra.mxu0 0.0
    %516 = vmatprep.subr.mxu0 0.0
    %517 = vmatpush2.msra.mxu0 0.0
    %518 = vmatprep.subr.mxu0 0.0
    %519 = vmatpush2.msra.mxu0 0.0
    %520 = vmatprep.subr.mxu0 0.0
    %521 = vmatpush2.msra.mxu0 0.0
    %522 = vmatprep.subr.mxu0 0.0
    %523 = vmatpush2.msra.mxu0 0.0
    %524 = vmatprep.subr.mxu0 0.0
    %525 = vmatpush2.msra.mxu0 0.0
    %526 = vmatprep.subr.mxu0 0.0
    %527 = vmatpush2.msra.mxu0 0.0
    %528 = vmatprep.subr.mxu0 0.0
    %529 = vmatpush2.msra.mxu0 0.0
    %530 = vmatprep.subr.mxu0 0.0
    %531 = vmatpush2.msra.mxu0 0.0
    %532 = vmatprep.subr.mxu0 0.0
    %533 = vmatpush2.msra.mxu0 0.0
    %534 = vmatprep.subr.mxu0 0.0
    %535 = vmatpush2.msra.mxu0 0.0
    %536 = vmatprep.subr.mxu0 0.0
    %537 = vmatpush2.msra.mxu0 0.0
    %538 = vmatprep.mubr.f32.mxu0 0.0
    %v539 = vand.u32 %v143, 4294901760
    %v540 = vsub.f32 %v143, %v539
    %v541 = vand.u32 %v540, 4294901760
    %542 = vmatmul.mubr.f32.gmra.mxu0 %v541
    %v543 = vpop.f32.mrf.mxu0
    %v544 = vadd.f32 %v446, %v543
    %v545 = vpop.f32.mrf.mxu0
    %546 = vmatprep.mubr.f32.mxu0 0.0
    %v547 = vand.u32 %v145, 4294901760
    %v548 = vsub.f32 %v145, %v547
    %v549 = vand.u32 %v548, 4294901760
    %550 = vmatmul.mubr.f32.gmra.mxu0 %v549
    %v551 = vpop.f32.mrf.mxu0
    %v552 = vadd.f32 %v453, %v551
    %v553 = vpop.f32.mrf.mxu0
    %554 = vmatprep.mubr.f32.mxu0 0.0
    %v555 = vand.u32 %v147, 4294901760
    %v556 = vsub.f32 %v147, %v555
    %v557 = vand.u32 %v556, 4294901760
    %558 = vmatmul.mubr.f32.gmra.mxu0 %v557
    %v559 = vpop.f32.mrf.mxu0
    %v560 = vadd.f32 %v460, %v559
    %v561 = vpop.f32.mrf.mxu0
    %562 = vmatprep.mubr.f32.mxu0 0.0
    %v563 = vand.u32 %v149, 4294901760
    %v564 = vsub.f32 %v149, %v563
    %v565 = vand.u32 %v564, 4294901760
    %566 = vmatmul.mubr.f32.gmra.mxu0 %v565
    %v567 = vpop.f32.mrf.mxu0
    %v568 = vadd.f32 %v467, %v567
    %v569 = vpop.f32.mrf.mxu0
    %570 = vdwg.mxu0
    %571 = vmatprep.subr.mxu0 0.0
    %572 = vmatpush1.msra.mxu0 0.0
    %573 = vmatprep.subr.mxu0 0.0
    %574 = vmatpush1.msra.mxu0 0.0
    %575 = vmatprep.subr.mxu0 0.0
    %576 = vmatpush1.msra.mxu0 0.0
    %577 = vmatprep.subr.mxu0 0.0
    %578 = vmatpush1.msra.mxu0 0.0
    %579 = vmatprep.subr.mxu0 0.0
    %580 = vmatpush1.msra.mxu0 0.0
    %581 = vmatprep.subr.mxu0 0.0
    %582 = vmatpush1.msra.mxu0 0.0
    %583 = vmatprep.subr.mxu0 0.0
    %584 = vmatpush1.msra.mxu0 0.0
    %585 = vmatprep.subr.mxu0 0.0
    %586 = vmatpush1.msra.mxu0 0.0
    %587 = vmatprep.subr.mxu0 0.0
    %588 = vmatpush1.msra.mxu0 0.0
    %589 = vmatprep.subr.mxu0 0.0
    %590 = vmatpush1.msra.mxu0 0.0
    %591 = vmatprep.subr.mxu0 0.0
    %592 = vmatpush1.msra.mxu0 0.0
    %593 = vmatprep.subr.mxu0 0.0
    %594 = vmatpush1.msra.mxu0 0.0
    %595 = vmatprep.subr.mxu0 0.0
    %v596 = vand.u32 %v117, 4294901760
    %v597 = vsub.f32 %v117, %v596
    %v598 = vand.u32 %v597, 4294901760
    %599 = vmatpush1.msra.mxu0 %v598
    %600 = vmatprep.subr.mxu0 0.0
    %v601 = vand.u32 %v116, 4294901760
    %v602 = vsub.f32 %v116, %v601
    %v603 = vand.u32 %v602, 4294901760
    %604 = vmatpush1.msra.mxu0 %v603
    %605 = vmatprep.subr.mxu0 0.0
    %v606 = vand.u32 %v115, 4294901760
    %v607 = vsub.f32 %v115, %v606
    %v608 = vand.u32 %v607, 4294901760
    %609 = vmatpush1.msra.mxu0 %v608
    %610 = vmatprep.subr.mxu0 0.0
    %v611 = vand.u32 %v114, 4294901760
    %v612 = vsub.f32 %v114, %v611
    %v613 = vand.u32 %v612, 4294901760
    %614 = vmatpush1.msra.mxu0 %v613
    %615 = vmatprep.subr.mxu0 0.0
    %616 = vmatpush2.msra.mxu0 0.0
    %617 = vmatprep.subr.mxu0 0.0
    %618 = vmatpush2.msra.mxu0 0.0
    %619 = vmatprep.subr.mxu0 0.0
    %620 = vmatpush2.msra.mxu0 0.0
    %621 = vmatprep.subr.mxu0 0.0
    %622 = vmatpush2.msra.mxu0 0.0
    %623 = vmatprep.subr.mxu0 0.0
    %624 = vmatpush2.msra.mxu0 0.0
    %625 = vmatprep.subr.mxu0 0.0
    %626 = vmatpush2.msra.mxu0 0.0
    %627 = vmatprep.subr.mxu0 0.0
    %628 = vmatpush2.msra.mxu0 0.0
    %629 = vmatprep.subr.mxu0 0.0
    %630 = vmatpush2.msra.mxu0 0.0
    %631 = vmatprep.subr.mxu0 0.0
    %632 = vmatpush2.msra.mxu0 0.0
    %633 = vmatprep.subr.mxu0 0.0
    %634 = vmatpush2.msra.mxu0 0.0
    %635 = vmatprep.subr.mxu0 0.0
    %636 = vmatpush2.msra.mxu0 0.0
    %637 = vmatprep.subr.mxu0 0.0
    %638 = vmatpush2.msra.mxu0 0.0
    %639 = vmatprep.subr.mxu0 0.0
    %640 = vmatpush2.msra.mxu0 0.0
    %641 = vmatprep.subr.mxu0 0.0
    %642 = vmatpush2.msra.mxu0 0.0
    %643 = vmatprep.subr.mxu0 0.0
    %644 = vmatpush2.msra.mxu0 0.0
    %645 = vmatprep.subr.mxu0 0.0
    %646 = vmatpush2.msra.mxu0 0.0
    %647 = vmatprep.mubr.f32.mxu0 0.0
    %v648 = vand.u32 %v143, 4294901760
    %649 = vmatmul.mubr.f32.gmra.mxu0 %v648
    %v650 = vpop.f32.mrf.mxu0
    %v651 = vadd.f32 %v544, %v650
    %v652 = vpop.f32.mrf.mxu0
    %653 = vmatprep.mubr.f32.mxu0 0.0
    %v654 = vand.u32 %v145, 4294901760
    %655 = vmatmul.mubr.f32.gmra.mxu0 %v654
    %v656 = vpop.f32.mrf.mxu0
    %v657 = vadd.f32 %v552, %v656
    %v658 = vpop.f32.mrf.mxu0
    %659 = vmatprep.mubr.f32.mxu0 0.0
    %v660 = vand.u32 %v147, 4294901760
    %661 = vmatmul.mubr.f32.gmra.mxu0 %v660
    %v662 = vpop.f32.mrf.mxu0
    %v663 = vadd.f32 %v560, %v662
    %v664 = vpop.f32.mrf.mxu0
    %665 = vmatprep.mubr.f32.mxu0 0.0
    %v666 = vand.u32 %v149, 4294901760
    %667 = vmatmul.mubr.f32.gmra.mxu0 %v666
    %v668 = vpop.f32.mrf.mxu0
    %v669 = vadd.f32 %v568, %v668
    %v670 = vpop.f32.mrf.mxu0
    %671 = vdwg.mxu0
    %672 = vmatprep.subr.mxu0 0.0
    %673 = vmatpush1.msra.mxu0 0.0
    %674 = vmatprep.subr.mxu0 0.0
    %675 = vmatpush1.msra.mxu0 0.0
    %676 = vmatprep.subr.mxu0 0.0
    %677 = vmatpush1.msra.mxu0 0.0
    %678 = vmatprep.subr.mxu0 0.0
    %679 = vmatpush1.msra.mxu0 0.0
    %680 = vmatprep.subr.mxu0 0.0
    %681 = vmatpush1.msra.mxu0 0.0
    %682 = vmatprep.subr.mxu0 0.0
    %683 = vmatpush1.msra.mxu0 0.0
    %684 = vmatprep.subr.mxu0 0.0
    %685 = vmatpush1.msra.mxu0 0.0
    %686 = vmatprep.subr.mxu0 0.0
    %687 = vmatpush1.msra.mxu0 0.0
    %688 = vmatprep.subr.mxu0 0.0
    %689 = vmatpush1.msra.mxu0 0.0
    %690 = vmatprep.subr.mxu0 0.0
    %691 = vmatpush1.msra.mxu0 0.0
    %692 = vmatprep.subr.mxu0 0.0
    %693 = vmatpush1.msra.mxu0 0.0
    %694 = vmatprep.subr.mxu0 0.0
    %695 = vmatpush1.msra.mxu0 0.0
    %696 = vmatprep.subr.mxu0 0.0
    %v697 = vand.u32 %v117, 4294901760
    %698 = vmatpush1.msra.mxu0 %v697
    %699 = vmatprep.subr.mxu0 0.0
    %v700 = vand.u32 %v116, 4294901760
    %701 = vmatpush1.msra.mxu0 %v700
    %702 = vmatprep.subr.mxu0 0.0
    %v703 = vand.u32 %v115, 4294901760
    %704 = vmatpush1.msra.mxu0 %v703
    %705 = vmatprep.subr.mxu0 0.0
    %v706 = vand.u32 %v114, 4294901760
    %707 = vmatpush1.msra.mxu0 %v706
    %708 = vmatprep.subr.mxu0 0.0
    %709 = vmatpush2.msra.mxu0 0.0
    %710 = vmatprep.subr.mxu0 0.0
    %711 = vmatpush2.msra.mxu0 0.0
    %712 = vmatprep.subr.mxu0 0.0
    %713 = vmatpush2.msra.mxu0 0.0
    %714 = vmatprep.subr.mxu0 0.0
    %715 = vmatpush2.msra.mxu0 0.0
    %716 = vmatprep.subr.mxu0 0.0
    %717 = vmatpush2.msra.mxu0 0.0
    %718 = vmatprep.subr.mxu0 0.0
    %719 = vmatpush2.msra.mxu0 0.0
    %720 = vmatprep.subr.mxu0 0.0
    %721 = vmatpush2.msra.mxu0 0.0
    %722 = vmatprep.subr.mxu0 0.0
    %723 = vmatpush2.msra.mxu0 0.0
    %724 = vmatprep.subr.mxu0 0.0
    %725 = vmatpush2.msra.mxu0 0.0
    %726 = vmatprep.subr.mxu0 0.0
    %727 = vmatpush2.msra.mxu0 0.0
    %728 = vmatprep.subr.mxu0 0.0
    %729 = vmatpush2.msra.mxu0 0.0
    %730 = vmatprep.subr.mxu0 0.0
    %731 = vmatpush2.msra.mxu0 0.0
    %732 = vmatprep.subr.mxu0 0.0
    %733 = vmatpush2.msra.mxu0 0.0
    %734 = vmatprep.subr.mxu0 0.0
    %735 = vmatpush2.msra.mxu0 0.0
    %736 = vmatprep.subr.mxu0 0.0
    %737 = vmatpush2.msra.mxu0 0.0
    %738 = vmatprep.subr.mxu0 0.0
    %739 = vmatpush2.msra.mxu0 0.0
    %740 = vmatprep.mubr.f32.mxu0 0.0
    %v741 = vand.u32 %v143, 4294901760
    %742 = vmatmul.mubr.f32.gmra.mxu0 %v741
    %v743 = vpop.f32.mrf.mxu0
    %v744 = vadd.f32 %v651, %v743
    %v745 = vpop.f32.mrf.mxu0
    %746 = vmatprep.mubr.f32.mxu0 0.0
    %v747 = vand.u32 %v145, 4294901760
    %748 = vmatmul.mubr.f32.gmra.mxu0 %v747
    %v749 = vpop.f32.mrf.mxu0
    %v750 = vadd.f32 %v657, %v749
    %v751 = vpop.f32.mrf.mxu0
    %752 = vmatprep.mubr.f32.mxu0 0.0
    %v753 = vand.u32 %v147, 4294901760
    %754 = vmatmul.mubr.f32.gmra.mxu0 %v753
    %v755 = vpop.f32.mrf.mxu0
    %v756 = vadd.f32 %v663, %v755
    %v757 = vpop.f32.mrf.mxu0
    %758 = vmatprep.mubr.f32.mxu0 0.0
    %v759 = vand.u32 %v149, 4294901760
    %760 = vmatmul.mubr.f32.gmra.mxu0 %v759
    %v761 = vpop.f32.mrf.mxu0
    %v762 = vadd.f32 %v669, %v761
    %v763 = vpop.f32.mrf.mxu0
    %764 = vdwg.mxu0
    %vm765 = vcmp.ge.f32.partialorder %v744, 0.0
    %vm766 = vcmp.ge.f32.partialorder %v750, 0.0
    %vm767 = vcmp.ge.f32.partialorder %v756, 0.0
    %vm768 = vcmp.ge.f32.partialorder %v762, 0.0
    %v769 = vmul.f32 %v744, 0.2
    %v770 = vmul.f32 %v750, 0.2
    %v771 = vmul.f32 %v756, 0.2
    %v772 = vmul.f32 %v762, 0.2
    %v773 = vsel %vm765, %v744, %v769
    %v774 = vsel %vm766, %v750, %v770
    %v775 = vsel %vm767, %v756, %v771
    %v776 = vsel %vm768, %v762, %v772
    %v777 = vld [vmem:[#allocation2 + $0x40] sm:$0xff]
    %v778 = vld [vmem:[#allocation2 + $0x48] sm:$0xff]
    %v779 = vld [vmem:[#allocation2 + $0x50] sm:$0xff]
    %v780 = vld [vmem:[#allocation2 + $0x58] sm:$0xff]
    %v781 = vld [vmem:[#allocation2 + $0x40] sm:$0x1]
    %783 = vset.pattern.permute.xlu0 0
    %784 = vperm.xlu0 %783, %v777
    %v785 = vpop.permute.xlu0 %784
    %788 = vset.pattern.permute.xlu0 0
    %789 = vperm.xlu0 %788, %v778
    %v790 = vpop.permute.xlu0 %789
    %793 = vset.pattern.permute.xlu0 0
    %794 = vperm.xlu0 %793, %v779
    %v795 = vpop.permute.xlu0 %794
    %798 = vset.pattern.permute.xlu0 0
    %799 = vperm.xlu0 %798, %v780
    %v800 = vpop.permute.xlu0 %799
    %v802 = vmul.f32 %v785, %v773
    %v803 = vmul.f32 %v790, %v774
    %v804 = vmul.f32 %v795, %v775
    %v805 = vmul.f32 %v800, %v776
    %v806 = vadd.f32 %v802, %v803
    %v807 = vadd.f32 %v806, %v804
    %v808 = vadd.f32 %v807, %v805
    %v809 = vrot.slane %v808, 4
    %v810 = vadd.f32 %v808, %v809
    %v811 = vrot.slane %v810, 2
    %v812 = vadd.f32 %v810, %v811
    %v813 = vrot.slane %v812, 1
    %v814 = vadd.f32 %v812, %v813
    %816 = vset.pattern.permute.xlu0 1
    %817 = vperm.xlu0 %816, %v781
    %v818 = vpop.permute.xlu0 %817
    %v820 = vadd.f32 %v814, %v818
    %vm821 = vcmp.ge.f32.partialorder %v820, 0.0
    %v822 = vmul.f32 %v820, 0.2
    %v823 = vsel %vm821, %v820, %v822
    %824 = vst [vmem:[%s2] sm:$0x1] %v823
    // Predicated region
    $region14: #{mlp_forward_pallas.1} parent=1 // pred_check
      _
    $region15: #{mlp_forward_pallas.1} parent=1 // pred_check_branch
      %826 = sbr.rel (0) target = $region17
    $region16: #{mlp_forward_pallas.1} parent=1 // pred_region
      _
    $region17: #{mlp_forward_pallas.1} parent=1 // pred_fallthru
      _
    // Predicated region
    $region18: #{mlp_forward_pallas.1} parent=1 // pred_check
      _
    $region19: #{mlp_forward_pallas.1} parent=1 // pred_check_branch
      %828 = sbr.rel (0) target = $region21
    $region20: #{mlp_forward_pallas.1} parent=1 // pred_region
      _
    $region21: #{mlp_forward_pallas.1} parent=1 // pred_fallthru
      _
    %829 = vsyncpa [#allocation3], 1

</llo_original>
